<compile_context>
chip_gen: v6e
topology: v6e:2x2x1
jax: 0.10.0
libtpu: 0.0.40
codegen_flags: <defaults>
</compile_context>

<pallas_src>
import functools

import jax
import jax.numpy as jnp
from jax.experimental import pallas as pl
from jax.experimental.pallas import tpu as pltpu


def _round_up(x, m):
    return (x + m - 1) // m * m


def sublayer_kernel(x_ref, w_ref, b_ref, gain_ref, beta_ref, o_ref, *,
                    d_model, d_padded, eps):
    # x_ref : (TM, Dp) f32     w_ref : (Dp, Dp) f32 (= W^T, zero-padded)
    # b_ref / gain_ref / beta_ref : (1, Dp) f32 (zero-padded)
    # o_ref : (TM, Dp) f32
    x = x_ref[...]
    w = w_ref[...]
    b = b_ref[...]
    gain = gain_ref[...]
    beta = beta_ref[...]

    # sublayer: Linear(d_model, d_model)  (MXU, f32 accumulation)
    y = jnp.dot(x, w, preferred_element_type=jnp.float32)
    # Fold the Linear bias into the residual add (single elementwise pass);
    # padded lanes stay exactly 0 (x, W^T columns and b are zero there).
    z = y + (x + b)

    # LayerNormalization over the ORIGINAL d_model lanes.
    # Padded lanes of z are exactly 0, so the full-width sum equals the
    # valid-lane sum -> mean is exact without masking.
    inv_d = 1.0 / d_model
    mean = jnp.sum(z, axis=-1, keepdims=True) * inv_d

    diff = z - mean
    if d_padded > d_model:
        # Padded lanes of diff would be (-mean); mask them out of the variance.
        lane = jax.lax.broadcasted_iota(jnp.int32, (1, d_padded), 1)
        diff = jnp.where(lane < d_model, diff, 0.0)

    # unbiased variance / std (torch.std default: divide by d-1)
    var = jnp.sum(diff * diff, axis=-1, keepdims=True) * (1.0 / (d_model - 1))
    std = jnp.sqrt(var)
    # one reciprocal per row instead of TM*Dp divides
    inv = pl.reciprocal(std + eps, approx=False)

    # Padded output lanes: diff==0 (masked) * anything + beta(=0) -> 0.
    o_ref[...] = diff * (gain * inv) + beta


def sublayer_forward(x, w_t, b, gain, beta, *, eps=1e-6):
    """x: (B, S, D) f32.  w_t: (D, D) = W.T.  b/gain/beta: (D,)."""
    B, S, D = x.shape
    N = B * S

    # Lane-dense / sublane-aligned padded shapes.
    Dp = _round_up(D, 128)                 # 128-lane dense stores & MXU width
    TM = min(512, _round_up(N, 8))         # row tile, f32 sublane multiple
    Np = _round_up(N, TM)

    x_flat = x.reshape(N, D).astype(jnp.float32)
    if Np == N and Dp == D:
        x2 = x_flat
        w2 = w_t.astype(jnp.float32)
        b2 = b.reshape(1, D).astype(jnp.float32)
        g2 = gain.reshape(1, D).astype(jnp.float32)
        be2 = beta.reshape(1, D).astype(jnp.float32)
    else:
        x2 = jnp.zeros((Np, Dp), jnp.float32).at[:N, :D].set(x_flat)
        w2 = jnp.zeros((Dp, Dp), jnp.float32).at[:D, :D].set(w_t)
        b2 = jnp.zeros((1, Dp), jnp.float32).at[0, :D].set(b)
        g2 = jnp.zeros((1, Dp), jnp.float32).at[0, :D].set(gain)
        be2 = jnp.zeros((1, Dp), jnp.float32).at[0, :D].set(beta)

    grid = (Np // TM,)
    kernel = functools.partial(
        sublayer_kernel, d_model=D, d_padded=Dp, eps=float(eps))

    # Scheduler hint for XLA around the custom call.
    cost = pl.CostEstimate(
        flops=2 * Np * Dp * Dp + 8 * Np * Dp,
        transcendentals=2 * Np,
        bytes_accessed=4 * (2 * Np * Dp + Dp * Dp + 3 * Dp),
    )

    # VMEM budget: double-buffered x/out tiles + resident weight + param rows.
    vmem_bytes = 4 * (2 * 2 * TM * Dp + 2 * Dp * Dp + 6 * Dp) + (1 << 20)
    vmem_bytes = int(min(max(vmem_bytes, 4 << 20), 48 << 20))

    out2 = pl.pallas_call(
        kernel,
        out_shape=jax.ShapeDtypeStruct((Np, Dp), jnp.float32),
        grid=grid,
        in_specs=[
            pl.BlockSpec((TM, Dp), lambda i: (i, 0)),   # row-tiled activations
            pl.BlockSpec((Dp, Dp), lambda i: (0, 0)),   # VMEM-resident weight
            pl.BlockSpec((1, Dp), lambda i: (0, 0)),
            pl.BlockSpec((1, Dp), lambda i: (0, 0)),
            pl.BlockSpec((1, Dp), lambda i: (0, 0)),
        ],
        out_specs=pl.BlockSpec((TM, Dp), lambda i: (i, 0)),
        compiler_params=pltpu.CompilerParams(
            dimension_semantics=("parallel",),          # megacore sharding on v7x
            vmem_limit_bytes=vmem_bytes,
        ),
        cost_estimate=cost,
    )(x2, w2, b2, g2, be2)

    return out2[:N, :D].reshape(B, S, D)


def reference_forward(x, w_t, b, gain, beta, eps=1e-6):
    """Pure-JAX reference matching the PyTorch module semantics."""
    y = jnp.einsum("bsd,de->bse", x, w_t) + b
    z = y + x
    mean = jnp.mean(z, axis=-1, keepdims=True)
    diff = z - mean
    d = z.shape[-1]
    std = jnp.sqrt(jnp.sum(diff * diff, axis=-1, keepdims=True) / (d - 1))
    return gain * diff / (std + eps) + beta


if __name__ == "__main__":
    B, S, D = 2, 8, 32  # batch, seq, d_model

    key = jax.random.PRNGKey(0)
    kx, kw, kb = jax.random.split(key, 3)

    x = jax.random.normal(kx, (B, S, D), dtype=jnp.float32)

    # Linear weight W: (out, in) -> pass W^T so y = x @ W^T; bias b: (out,)
    bound = 1.0 / jnp.sqrt(D)
    W = jax.random.uniform(kw, (D, D), minval=-bound, maxval=bound,
                           dtype=jnp.float32)
    b = jax.random.uniform(kb, (D,), minval=-bound, maxval=bound,
                           dtype=jnp.float32)
    w_t = W.T

    # LayerNormalization params (as in __init__): gain=ones, bias=zeros
    gain = jnp.ones((D,), dtype=jnp.float32)
    beta = jnp.zeros((D,), dtype=jnp.float32)

    out = sublayer_forward(x, w_t, b, gain, beta)
    out = jax.block_until_ready(out)

    ref = reference_forward(x, w_t, b, gain, beta)
    assert out.shape == (B, S, D)
    assert jnp.allclose(out, ref, atol=1e-4, rtol=1e-4)

    print("KERNEL_OK")
</pallas_src>

<mosaic_0001>
module attributes {stable_mosaic.version = 11 : i64} {
  func.func @sublayer_kernel(%arg0: i32, %arg1: memref<16x128xf32, #tpu.memory_space<vmem>>, %arg2: memref<128x128xf32, #tpu.memory_space<vmem>>, %arg3: memref<1x128xf32, #tpu.memory_space<vmem>>, %arg4: memref<1x128xf32, #tpu.memory_space<vmem>>, %arg5: memref<1x128xf32, #tpu.memory_space<vmem>>, %arg6: memref<16x128xf32, #tpu.memory_space<vmem>>) attributes {dimension_semantics = [#tpu.dimension_semantics<parallel>], iteration_bounds = array<i64: 1>, scalar_prefetch = 0 : i64, scratch_operands = 0 : i64, tpu.core_type = #tpu.core_type<tc>, window_params = [{transform_indices = @transform_0, window_bounds = array<i64: 16, 128>}, {pipeline_mode = #tpu.pipeline_mode<synchronous>, transform_indices = @transform_1, window_bounds = array<i64: 128, 128>}, {pipeline_mode = #tpu.pipeline_mode<synchronous>, transform_indices = @transform_2, window_bounds = array<i64: 1, 128>}, {pipeline_mode = #tpu.pipeline_mode<synchronous>, transform_indices = @transform_3, window_bounds = array<i64: 1, 128>}, {pipeline_mode = #tpu.pipeline_mode<synchronous>, transform_indices = @transform_4, window_bounds = array<i64: 1, 128>}, {transform_indices = @transform_5, window_bounds = array<i64: 16, 128>}]} {
    %c0 = arith.constant 0 : index
    %c0_0 = arith.constant 0 : index
    %0 = vector.load %arg1[%c0, %c0_0] : memref<16x128xf32, #tpu.memory_space<vmem>>, vector<16x128xf32>
    %c0_1 = arith.constant 0 : index
    %c0_2 = arith.constant 0 : index
    %1 = vector.load %arg2[%c0_1, %c0_2] : memref<128x128xf32, #tpu.memory_space<vmem>>, vector<128x128xf32>
    %c0_3 = arith.constant 0 : index
    %c0_4 = arith.constant 0 : index
    %2 = vector.load %arg3[%c0_3, %c0_4] : memref<1x128xf32, #tpu.memory_space<vmem>>, vector<1x128xf32>
    %c0_5 = arith.constant 0 : index
    %c0_6 = arith.constant 0 : index
    %3 = vector.load %arg4[%c0_5, %c0_6] : memref<1x128xf32, #tpu.memory_space<vmem>>, vector<1x128xf32>
    %c0_7 = arith.constant 0 : index
    %c0_8 = arith.constant 0 : index
    %4 = vector.load %arg5[%c0_7, %c0_8] : memref<1x128xf32, #tpu.memory_space<vmem>>, vector<1x128xf32>
    %cst = arith.constant dense<0.000000e+00> : vector<16x128xf32>
    %5 = tpu.matmul %0, %1, %cst {dimension_numbers = #tpu.dot_dimension_numbers<[1], [0], [0], [1], [0, 0, 1, 1], [], []>} : vector<16x128xf32>, vector<128x128xf32>, vector<16x128xf32> -> vector<16x128xf32>
    %6 = vector.broadcast %2 : vector<1x128xf32> to vector<16x128xf32>
    %7 = arith.addf %0, %6 : vector<16x128xf32>
    %8 = arith.addf %5, %7 : vector<16x128xf32>
    %cst_9 = arith.constant dense<0.000000e+00> : vector<16xf32>
    %9 = vector.multi_reduction <add>, %8, %cst_9 [1] : vector<16x128xf32> to vector<16xf32>
    %10 = vector.shape_cast %9 : vector<16xf32> to vector<16x1xf32>
    %cst_10 = arith.constant 3.125000e-02 : f32
    %11 = vector.broadcast %cst_10 : f32 to vector<16x1xf32>
    %12 = arith.mulf %10, %11 : vector<16x1xf32>
    %13 = vector.broadcast %12 : vector<16x1xf32> to vector<16x128xf32>
    %14 = arith.subf %8, %13 : vector<16x128xf32>
    %15 = tpu.iota {dimensions = array<i32: 1>} : vector<1x128xi32>
    %c32_i32 = arith.constant 32 : i32
    %16 = vector.broadcast %c32_i32 : i32 to vector<1x128xi32>
    %17 = arith.cmpi slt, %15, %16 : vector<1x128xi32>
    %cst_11 = arith.constant 0.000000e+00 : f32
    %18 = vector.shape_cast %17 : vector<1x128xi1> to vector<1x128xi1>
    %19 = vector.broadcast %18 : vector<1x128xi1> to vector<16x128xi1>
    %20 = vector.broadcast %cst_11 : f32 to vector<16x128xf32>
    %21 = arith.select %19, %14, %20 : vector<16x128xi1>, vector<16x128xf32>
    %22 = arith.mulf %21, %21 : vector<16x128xf32>
    %cst_12 = arith.constant dense<0.000000e+00> : vector<16xf32>
    %23 = vector.multi_reduction <add>, %22, %cst_12 [1] : vector<16x128xf32> to vector<16xf32>
    %24 = vector.shape_cast %23 : vector<16xf32> to vector<16x1xf32>
    %cst_13 = arith.constant 0.0322580636 : f32
    %25 = vector.broadcast %cst_13 : f32 to vector<16x1xf32>
    %26 = arith.mulf %24, %25 : vector<16x1xf32>
    %27 = math.sqrt %26 : vector<16x1xf32>
    %cst_14 = arith.constant 9.99999997E-7 : f32
    %28 = vector.broadcast %cst_14 : f32 to vector<16x1xf32>
    %29 = arith.addf %27, %28 : vector<16x1xf32>
    %30 = tpu.reciprocal %29 : vector<16x1xf32> -> vector<16x1xf32>
    %31 = vector.broadcast %3 : vector<1x128xf32> to vector<16x128xf32>
    %32 = vector.broadcast %30 : vector<16x1xf32> to vector<16x128xf32>
    %33 = arith.mulf %31, %32 : vector<16x128xf32>
    %34 = arith.mulf %21, %33 : vector<16x128xf32>
    %35 = vector.broadcast %4 : vector<1x128xf32> to vector<16x128xf32>
    %36 = arith.addf %34, %35 : vector<16x128xf32>
    %c0_15 = arith.constant 0 : index
    %c0_16 = arith.constant 0 : index
    %37 = vector.load %arg6[%c0_15, %c0_16] : memref<16x128xf32, #tpu.memory_space<vmem>>, vector<16x128xf32>
    tpu.vector_store %arg6[%c0_15, %c0_16], %36 {strides = array<i32>} : memref<16x128xf32, #tpu.memory_space<vmem>>, vector<16x128xf32>,
    return
  }
  func.func @transform_0(%arg0: i32) -> (i32, i32) {
    %c0_i32 = arith.constant 0 : i32
    %c0_i32_0 = arith.constant 0 : i32
    return %arg0, %c0_i32 : i32, i32
  }
  func.func @transform_1(%arg0: i32) -> (i32, i32) {
    %c0_i32 = arith.constant 0 : i32
    %c0_i32_0 = arith.constant 0 : i32
    %c0_i32_1 = arith.constant 0 : i32
    return %c0_i32, %c0_i32_0 : i32, i32
  }
  func.func @transform_2(%arg0: i32) -> (i32, i32) {
    %c0_i32 = arith.constant 0 : i32
    %c0_i32_0 = arith.constant 0 : i32
    %c0_i32_1 = arith.constant 0 : i32
    return %c0_i32, %c0_i32_0 : i32, i32
  }
  func.func @transform_3(%arg0: i32) -> (i32, i32) {
    %c0_i32 = arith.constant 0 : i32
    %c0_i32_0 = arith.constant 0 : i32
    %c0_i32_1 = arith.constant 0 : i32
    return %c0_i32, %c0_i32_0 : i32, i32
  }
  func.func @transform_4(%arg0: i32) -> (i32, i32) {
    %c0_i32 = arith.constant 0 : i32
    %c0_i32_0 = arith.constant 0 : i32
    %c0_i32_1 = arith.constant 0 : i32
    return %c0_i32, %c0_i32_0 : i32, i32
  }
  func.func @transform_5(%arg0: i32) -> (i32, i32) {
    %c0_i32 = arith.constant 0 : i32
    %c0_i32_0 = arith.constant 0 : i32
    return %arg0, %c0_i32 : i32, i32
  }
}

</mosaic_0001>

<llo_original>
// kernel: tpu_custom_call.1
$region0: #{tpu_custom_call.1}
  #allocation0 [shape = 'u32[]', space=smem, size = 0x4, offset = 0x4, fixed_abs, tag = 'smem constant byte address 0x4 - core index']
  #allocation1 [shape = 'u32[144,128]{1,0:T(1,128)}', space=vmem, size = 0x12000, scoped, tag = 'internal scratch']
  %s0 = inlined_call_operand.hbm [shape: f32[16,128], index: 0, kind: input, shape index: {}]
  %s1 = inlined_call_operand.hbm [shape: f32[128,128], index: 1, kind: input, shape index: {}]
  %s2 = inlined_call_operand.vmem [shape: f32[1,128], index: 2, kind: input, shape index: {}]
  %s3 = inlined_call_operand.vmem [shape: f32[1,128], index: 3, kind: input, shape index: {}]
  %s4 = inlined_call_operand.vmem [shape: f32[1,128], index: 4, kind: input, shape index: {}]
  %s5 = inlined_call_operand.hbm [shape: f32[16,128], index: 5, kind: output, shape index: {}]
  %s6 = sld [smem:[#allocation0]]
  $region38: #{tpu_custom_call.1} parent=0
    _
  %s8 = ssub.s32 1, %s6
  %s9 = scalar_select 0, %s8, %s6
  $region1: #{tpu_custom_call.1} parent=0
    #allocation2 [shape = 'u8[8192]{0}', space=vmem, size = 0x2000, scoped, tag = 'input window, operand 0, single buffered']
    #allocation3 [shape = 's32[1]{0}', space=sflag, size = 0x4, scoped, tag = 'scoped memory for tpu_custom_call.1']
    #allocation4 [shape = 's32[1]{0}', space=sflag, size = 0x4, scoped, tag = 'scoped memory for tpu_custom_call.1']
    #allocation5 [shape = 'u8[65536]{0}', space=vmem, size = 0x10000, scoped, tag = 'input window, operand 1, single buffered']
    #allocation6 [shape = 's32[1]{0}', space=sflag, size = 0x4, scoped, tag = 'scoped memory for tpu_custom_call.1']
    #allocation7 [shape = 'u8[8192]{0}', space=vmem, size = 0x2000, scoped, tag = 'output window, operand 0, single buffered']
    %10 = vsyncpa [#allocation3], 0
    %11 = vsyncpa [#allocation6], 0
    %12 = vsyncpa [#allocation4], 0
    // Predicated region
    $region2: #{tpu_custom_call.1} parent=1 // pred_check
      _
    $region3: #{tpu_custom_call.1} parent=1 // pred_check_branch
      %14 = sbr.rel (0) target = $region5
    $region4: #{tpu_custom_call.1} parent=1 // pred_region
      %s16 = ssub.s32 256, 256
      %17 = vsyncadd [#allocation3], %s16
      %s18 = sshll.u32 [#allocation2], 4
      %s19 = int_to_ptr.vmem [resolvable:$true] %s18
      %24 = dma.hbm_to_vmem [thread:$0]  %s0, 256, %s19, [#allocation3], 128, 128, 8
    $region5: #{tpu_custom_call.1} parent=1 // pred_fallthru
      _
    // Predicated region
    $region6: #{tpu_custom_call.1} parent=1 // pred_check
      _
    $region7: #{tpu_custom_call.1} parent=1 // pred_check_branch
      %26 = sbr.rel (0) target = $region9
    $region8: #{tpu_custom_call.1} parent=1 // pred_region
      %s28 = ssub.s32 2048, 2048
      %29 = vsyncadd [#allocation6], %s28
      %s30 = sshll.u32 [#allocation5], 4
      %s31 = int_to_ptr.vmem [resolvable:$true] %s30
      %36 = dma.hbm_to_vmem [thread:$0]  %s1, 2048, %s31, [#allocation6], 128, 128, 8
    $region9: #{tpu_custom_call.1} parent=1 // pred_fallthru
      _
    // Predicated region
    $region10: #{tpu_custom_call.1} parent=1 // pred_check
      _
    $region11: #{tpu_custom_call.1} parent=1 // pred_check_branch
      %38 = sbr.rel (0) target = $region13
    $region12: #{tpu_custom_call.1} parent=1 // pred_region
      _
    $region13: #{tpu_custom_call.1} parent=1 // pred_fallthru
      _
    // Predicated region
    $region14: #{tpu_custom_call.1} parent=1 // pred_check
      _
    $region15: #{tpu_custom_call.1} parent=1 // pred_check_branch
      %40 = sbr.rel (0) target = $region17
    $region16: #{tpu_custom_call.1} parent=1 // pred_region
      _
    $region17: #{tpu_custom_call.1} parent=1 // pred_fallthru
      _
    // Predicated region
    $region18: #{tpu_custom_call.1} parent=1 // pred_check
      _
    $region19: #{tpu_custom_call.1} parent=1 // pred_check_branch
      %42 = sbr.rel (0) target = $region21
    $region20: #{tpu_custom_call.1} parent=1 // pred_region
      _
    $region21: #{tpu_custom_call.1} parent=1 // pred_fallthru
      _
    // Predicated region
    $region22: #{tpu_custom_call.1} parent=1 // pred_check
      _
    $region23: #{tpu_custom_call.1} parent=1 // pred_check_branch
      %44 = sbr.rel (0) target = $region25
    $region24: #{tpu_custom_call.1} parent=1 // pred_region
      %45 = dma.done [#allocation3], 256
    $region25: #{tpu_custom_call.1} parent=1 // pred_fallthru
      _
    // Predicated region
    $region26: #{tpu_custom_call.1} parent=1 // pred_check
      _
    $region27: #{tpu_custom_call.1} parent=1 // pred_check_branch
      %47 = sbr.rel (0) target = $region29
    $region28: #{tpu_custom_call.1} parent=1 // pred_region
      %48 = dma.done [#allocation6], 2048
    $region29: #{tpu_custom_call.1} parent=1 // pred_fallthru
      _
    %v49 = vld [vmem:[#allocation2] sm:$0xff]
    %v50 = vld [vmem:[#allocation2 + $0x8] sm:$0xff]
    %v51 = vld [vmem:[#allocation5] sm:$0xff]
    %v52 = vld [vmem:[#allocation5 + $0x8] sm:$0xff]
    %v53 = vld [vmem:[#allocation5 + $0x10] sm:$0xff]
    %v54 = vld [vmem:[#allocation5 + $0x18] sm:$0xff]
    %v55 = vld [vmem:[#allocation5 + $0x20] sm:$0xff]
    %v56 = vld [vmem:[#allocation5 + $0x28] sm:$0xff]
    %v57 = vld [vmem:[#allocation5 + $0x30] sm:$0xff]
    %v58 = vld [vmem:[#allocation5 + $0x38] sm:$0xff]
    %v59 = vld [vmem:[#allocation5 + $0x40] sm:$0xff]
    %v60 = vld [vmem:[#allocation5 + $0x48] sm:$0xff]
    %v61 = vld [vmem:[#allocation5 + $0x50] sm:$0xff]
    %v62 = vld [vmem:[#allocation5 + $0x58] sm:$0xff]
    %v63 = vld [vmem:[#allocation5 + $0x60] sm:$0xff]
    %v64 = vld [vmem:[#allocation5 + $0x68] sm:$0xff]
    %v65 = vld [vmem:[#allocation5 + $0x70] sm:$0xff]
    %v66 = vld [vmem:[#allocation5 + $0x78] sm:$0xff]
    %v67 = vld [vmem:[%s2] sm:$0x1]
    %v68 = vld [vmem:[%s3] sm:$0x1]
    %v69 = vld [vmem:[%s4] sm:$0x1]
    %v71 = vlaneseq
    %v72 = vshrl.u32 %v71, 7
    %v73 = vsub.s32 0, %v72
    %v74 = vrot.slane %v67, %v73
    %v76 = vadd.f32 %v49, %v74
    %v77 = vadd.f32 %v50, %v74
    %78 = vmatprep.subr.mxu0 0.0
    %79 = vmatpush1.msra.mxu0 %v66
    %80 = vmatprep.subr.mxu0 0.0
    %81 = vmatpush1.msra.mxu0 %v65
    %82 = vmatprep.subr.mxu0 0.0
    %83 = vmatpush1.msra.mxu0 %v64
    %84 = vmatprep.subr.mxu0 0.0
    %85 = vmatpush1.msra.mxu0 %v63
    %86 = vmatprep.subr.mxu0 0.0
    %87 = vmatpush1.msra.mxu0 %v62
    %88 = vmatprep.subr.mxu0 0.0
    %89 = vmatpush1.msra.mxu0 %v61
    %90 = vmatprep.subr.mxu0 0.0
    %91 = vmatpush1.msra.mxu0 %v60
    %92 = vmatprep.subr.mxu0 0.0
    %93 = vmatpush1.msra.mxu0 %v59
    %94 = vmatprep.subr.mxu0 0.0
    %95 = vmatpush1.msra.mxu0 %v58
    %96 = vmatprep.subr.mxu0 0.0
    %97 = vmatpush1.msra.mxu0 %v57
    %98 = vmatprep.subr.mxu0 0.0
    %99 = vmatpush1.msra.mxu0 %v56
    %100 = vmatprep.subr.mxu0 0.0
    %101 = vmatpush1.msra.mxu0 %v55
    %102 = vmatprep.subr.mxu0 0.0
    %103 = vmatpush1.msra.mxu0 %v54
    %104 = vmatprep.subr.mxu0 0.0
    %105 = vmatpush1.msra.mxu0 %v53
    %106 = vmatprep.subr.mxu0 0.0
    %107 = vmatpush1.msra.mxu0 %v52
    %108 = vmatprep.subr.mxu0 0.0
    %109 = vmatpush1.msra.mxu0 %v51
    %110 = vmatprep.subr.mxu0 0.0
    %111 = vmatpush2.msra.mxu0 0.0
    %112 = vmatprep.subr.mxu0 0.0
    %113 = vmatpush2.msra.mxu0 0.0
    %114 = vmatprep.subr.mxu0 0.0
    %115 = vmatpush2.msra.mxu0 0.0
    %116 = vmatprep.subr.mxu0 0.0
    %117 = vmatpush2.msra.mxu0 0.0
    %118 = vmatprep.subr.mxu0 0.0
    %119 = vmatpush2.msra.mxu0 0.0
    %120 = vmatprep.subr.mxu0 0.0
    %121 = vmatpush2.msra.mxu0 0.0
    %122 = vmatprep.subr.mxu0 0.0
    %123 = vmatpush2.msra.mxu0 0.0
    %124 = vmatprep.subr.mxu0 0.0
    %125 = vmatpush2.msra.mxu0 0.0
    %126 = vmatprep.subr.mxu0 0.0
    %127 = vmatpush2.msra.mxu0 0.0
    %128 = vmatprep.subr.mxu0 0.0
    %129 = vmatpush2.msra.mxu0 0.0
    %130 = vmatprep.subr.mxu0 0.0
    %131 = vmatpush2.msra.mxu0 0.0
    %132 = vmatprep.subr.mxu0 0.0
    %133 = vmatpush2.msra.mxu0 0.0
    %134 = vmatprep.subr.mxu0 0.0
    %135 = vmatpush2.msra.mxu0 0.0
    %136 = vmatprep.subr.mxu0 0.0
    %137 = vmatpush2.msra.mxu0 0.0
    %138 = vmatprep.subr.mxu0 0.0
    %139 = vmatpush2.msra.mxu0 0.0
    %140 = vmatprep.subr.mxu0 0.0
    %141 = vmatpush2.msra.mxu0 0.0
    %142 = vmatprep.mubr.f32.mxu0 0.0
    %143 = vmatmul.mubr.f32.gmra.mxu0 %v49
    %v144 = vpop.f32.mrf.mxu0
    %v145 = vadd.f32 %v76, %v144
    %v146 = vpop.f32.mrf.mxu0
    %147 = vmatprep.mubr.f32.mxu0 0.0
    %148 = vmatmul.mubr.f32.gmra.mxu0 %v50
    %v149 = vpop.f32.mrf.mxu0
    %v150 = vadd.f32 %v77, %v149
    %v151 = vpop.f32.mrf.mxu0
    %152 = vdwg.mxu0
    %153 = vadd.xlane.f32.xlu0 %v145
    %v154 = vpop.xlane.xlu0 %153
    %155 = vadd.xlane.f32.xlu0 %v150
    %v156 = vpop.xlane.xlu0 %155
    %v157 = vmul.f32 %v154, 0.03125
    %v158 = vmul.f32 %v156, 0.03125
    %v159 = vsub.f32 %v145, %v157
    %v160 = vsub.f32 %v150, %v158
    %v161 = vlaneseq
    %v162 = vand.u32 %v161, 127
    %vm163 = vcmp.lt.s32.totalorder %v162, 32
    %v164 = vsel %vm163, 1, 0
    %vm165 = vcmp.eq.s32.totalorder %v164, 1
    %v166 = vsel %vm165, %v159, 0.0
    %v167 = vsel %vm165, %v160, 0.0
    %v168 = vmul.f32 %v166, %v166
    %v169 = vmul.f32 %v167, %v167
    %170 = vadd.xlane.f32.xlu0 %v168
    %v171 = vpop.xlane.xlu0 %170
    %172 = vadd.xlane.f32.xlu0 %v169
    %v173 = vpop.xlane.xlu0 %172
    %v174 = vmul.f32 %v171, 0.032258064
    %v175 = vmul.f32 %v173, 0.032258064
    %v176 = vrsqrt.pop %v174
    %v177 = vmul.f32 %v174, %v176
    %vm178 = vcmp.eq.f32.partialorder %v174, inf
    %v179 = vsel %vm178, %v174, %v177
    %vm180 = vcmp.eq.f32.partialorder %v174, 0.0
    %v181 = vand.u32 %v174, 2147483648
    %v182 = vsel %vm180, %v181, %v179
    %v183 = vrsqrt.pop %v175
    %v184 = vmul.f32 %v175, %v183
    %vm185 = vcmp.eq.f32.partialorder %v175, inf
    %v186 = vsel %vm185, %v175, %v184
    %vm187 = vcmp.eq.f32.partialorder %v175, 0.0
    %v188 = vand.u32 %v175, 2147483648
    %v189 = vsel %vm187, %v188, %v186
    %v190 = vadd.f32 %v182, 1e-06
    %v191 = vadd.f32 %v189, 1e-06
    %v192 = vrcp.pop %v190
    %v193 = vrcp.pop %v191
    %v195 = vlaneseq
    %v196 = vshrl.u32 %v195, 7
    %v197 = vsub.s32 0, %v196
    %v198 = vrot.slane %v68, %v197
    %v200 = vmul.f32 %v198, %v192
    %v201 = vmul.f32 %v198, %v193
    %v202 = vmul.f32 %v166, %v200
    %v203 = vmul.f32 %v167, %v201
    %v205 = vlaneseq
    %v206 = vshrl.u32 %v205, 7
    %v207 = vsub.s32 0, %v206
    %v208 = vrot.slane %v69, %v207
    %v210 = vadd.f32 %v202, %v208
    %v211 = vadd.f32 %v203, %v208
    %212 = vst [vmem:[#allocation7] sm:$0xff] %v210
    %213 = vst [vmem:[#allocation7 + $0x8] sm:$0xff] %v211
    // Predicated region
    $region30: #{tpu_custom_call.1} parent=1 // pred_check
      _
    $region31: #{tpu_custom_call.1} parent=1 // pred_check_branch
      %215 = sbr.rel (0) target = $region33
    $region32: #{tpu_custom_call.1} parent=1 // pred_region
      %s217 = ssub.s32 256, 256
      %218 = vsyncadd [#allocation4], %s217
      %s219 = sshll.u32 [#allocation7], 4
      %s220 = int_to_ptr.vmem [resolvable:$true] %s219
      %225 = dma.vmem_to_hbm [thread:$0]  %s220, 256, %s5, [#allocation4], 128, 128, 8
    $region33: #{tpu_custom_call.1} parent=1 // pred_fallthru
      _
    // Predicated region
    $region34: #{tpu_custom_call.1} parent=1 // pred_check
      _
    $region35: #{tpu_custom_call.1} parent=1 // pred_check_branch
      %227 = sbr.rel (0) target = $region37
    $region36: #{tpu_custom_call.1} parent=1 // pred_region
      %228 = dma.done [#allocation4], 256
    $region37: #{tpu_custom_call.1} parent=1 // pred_fallthru
      _
    %229 = vsyncpa [#allocation3], 1
    %230 = vsyncpa [#allocation6], 1
    %231 = vsyncpa [#allocation4], 1

</llo_original>
